<compile_context>
chip_gen: v7x
topology: tpu7x:2x2x1
jax: 0.10.0
libtpu: 0.0.40
codegen_flags: <defaults>
</compile_context>

<pallas_src>
import jax
import jax.numpy as jnp
from jax.experimental import pallas as pl
from jax.experimental.pallas import tpu as pltpu


def _round_up(x, m):
    return (x + m - 1) // m * m


_LANE_TILE = 256      # multiple of 128; matches the v6e/v7x MXU width, fine on v5e
_ROW_ALIGN = 16       # bf16 sublane packing (also a multiple of the f32 tile of 8)


def _make_banknet_kernel(in_dims, out_dims, row_offsets, compute_dtype):
    """Fused 5x(Linear + ReLU) + Linear, batch on the lane axis.

    x_ref : [F, TB]             f32 (cast to compute_dtype in-kernel)
    w_ref : [rows, cols]        compute_dtype; layer l's W^T at rows
                                [row_offsets[l], +out_dims[l]), cols [:in_dims[l]]
    b_ref : [rows, 1]           f32; layer l's bias at the same row offsets
    o_ref : [out_dims[-1], TB]  f32 (lane-dense writeback)

    All slice bounds are static Python ints, so slicing is a zero-cost view.
    """
    n_layers = len(out_dims)

    def kernel(x_ref, w_ref, b_ref, o_ref):
        h = x_ref[...].astype(compute_dtype)                  # [F, TB]
        for l in range(n_layers):
            din, dout, off = in_dims[l], out_dims[l], row_offsets[l]
            w = w_ref[off:off + dout, :din]                   # [dout, din] = W_l^T
            b = b_ref[off:off + dout, :]                      # [dout, 1], f32
            acc = jnp.dot(w, h, preferred_element_type=jnp.float32) + b
            if l < n_layers - 1:
                # bias-add / ReLU in f32, then one downcast for the next MXU matmul.
                h = jnp.maximum(acc, 0.0).astype(compute_dtype)
            else:
                h = acc                                       # no ReLU on the last layer
        o_ref[...] = h.astype(o_ref.dtype)

    return kernel


def pack_params(params, compute_dtype):
    """Pack [(W[in,out], b[out]), ...] into one transposed-weight slab + one bias slab."""
    in_dims = tuple(int(w.shape[0]) for w, _ in params)
    out_dims = tuple(int(w.shape[1]) for w, _ in params)

    cols = _round_up(max(max(in_dims), 128), 128)             # lane-aligned K width
    offsets = []
    off = 0
    for dout in out_dims:
        offsets.append(off)
        off += _round_up(dout, _ROW_ALIGN)                    # sublane-aligned layer starts
    total_rows = _round_up(off, _ROW_ALIGN)

    w_slab = jnp.zeros((total_rows, cols), compute_dtype)
    b_slab = jnp.zeros((total_rows, 1), jnp.float32)
    for l, (w, b) in enumerate(params):
        w_slab = w_slab.at[offsets[l]:offsets[l] + out_dims[l], :in_dims[l]].set(
            w.T.astype(compute_dtype))                        # store W^T
        b_slab = b_slab.at[offsets[l]:offsets[l] + out_dims[l], 0].set(
            b.astype(jnp.float32))
    return w_slab, b_slab, in_dims, out_dims, tuple(offsets)


def banknet_forward(x, params, *, block_batch=2048, compute_dtype=jnp.bfloat16):
    """x: [B, ...] -> flattened to [B, F]. params: list of (W[in,out], b[out]).

    Returns [B, 2] f32, matching BankNet.forward.
    """
    B = x.shape[0]
    x2d = x.reshape(B, -1)                    # torch.flatten(x, 1); stays f32 here
    F = x2d.shape[1]

    w_slab, b_slab, in_dims, out_dims, offsets = pack_params(params, compute_dtype)
    out_dim = out_dims[-1]

    # Batch tile: lane-dense multiple of 256; force >= 2 grid steps when B allows
    # it so ("parallel",) can shard steps across v7x's two TensorCores.
    TB = min(block_batch, _round_up(B, _LANE_TILE))
    TB = max(_LANE_TILE, _round_up(TB, _LANE_TILE))
    Bp = _round_up(B, TB)
    if Bp // TB < 2 and B > _LANE_TILE:
        TB = _round_up(-(-Bp // 2), _LANE_TILE)
        Bp = _round_up(B, TB)

    # Feature-major (batch-on-lane) input for the kernel; x stays f32 — the
    # downcast to compute_dtype happens on the VPU inside the kernel.
    xT = x2d.T                                                # [F, B]
    if Bp != B:
        xT = jnp.pad(xT, ((0, 0), (0, Bp - B)))

    kernel = _make_banknet_kernel(in_dims, out_dims, offsets, compute_dtype)

    flops = 2 * Bp * sum(i * o for i, o in zip(in_dims, out_dims))
    bytes_accessed = (xT.size * xT.dtype.itemsize
                      + w_slab.size * w_slab.dtype.itemsize
                      + b_slab.size * b_slab.dtype.itemsize
                      + Bp * out_dim * 4)

    out = pl.pallas_call(
        kernel,
        out_shape=jax.ShapeDtypeStruct((out_dim, Bp), jnp.float32),
        grid=(Bp // TB,),
        in_specs=[
            # x^T: blocked along batch (lanes) -> pipelined HBM->VMEM per step.
            pl.BlockSpec((F, TB), lambda i: (0, i)),
            # weight / bias slabs: constant index maps -> fetched once, VMEM-resident.
            pl.BlockSpec(w_slab.shape, lambda i: (0, 0)),
            pl.BlockSpec(b_slab.shape, lambda i: (0, 0)),
        ],
        out_specs=pl.BlockSpec((out_dim, TB), lambda i: (0, i)),
        compiler_params=pltpu.CompilerParams(
            dimension_semantics=("parallel",)),   # shards batch steps across v7x's 2 TCs
        cost_estimate=pl.CostEstimate(flops=flops, transcendentals=0,
                                      bytes_accessed=bytes_accessed),
    )(xT, w_slab, b_slab)

    return out[:, :B].T                                       # [B, 2]


def init_banknet_params(num_of_features, key):
    """Deterministic init mimicking PyTorch nn.Linear default (U[-1/sqrt(fan_in), +])."""
    dims = [num_of_features, 64, 32, 16, 8, 4, 2]
    params = []
    for i in range(len(dims) - 1):
        fan_in, fan_out = dims[i], dims[i + 1]
        key, kw, kb = jax.random.split(key, 3)
        bound = 1.0 / jnp.sqrt(jnp.float32(fan_in))
        w = jax.random.uniform(kw, (fan_in, fan_out), jnp.float32,
                               minval=-bound, maxval=bound)
        b = jax.random.uniform(kb, (fan_out,), jnp.float32,
                               minval=-bound, maxval=bound)
        params.append((w, b))
    return params


def banknet_reference(x, params):
    """Pure-JAX f32 reference for correctness checking."""
    h = x.reshape(x.shape[0], -1)
    for i, (w, b) in enumerate(params):
        h = h @ w + b
        if i < len(params) - 1:
            h = jnp.maximum(h, 0.0)
    return h


if __name__ == "__main__":
    batch = 64
    num_of_features = 16

    key = jax.random.PRNGKey(0)
    key, kx = jax.random.split(key)
    x = jax.random.normal(kx, (batch, num_of_features), dtype=jnp.float32)
    params = init_banknet_params(num_of_features, key)

    ref = banknet_reference(x, params)

    # f32 path: tight math check.
    out_f32 = jax.block_until_ready(
        banknet_forward(x, params, compute_dtype=jnp.float32))
    assert out_f32.shape == (batch, 2), out_f32.shape
    assert jnp.allclose(out_f32, ref, atol=1e-4, rtol=1e-4), "f32 mismatch vs reference"

    # Default bf16 fast path: loose tolerance (f32 accumulation, bf16 operands).
    out_bf16 = jax.block_until_ready(banknet_forward(x, params))
    assert out_bf16.shape == (batch, 2), out_bf16.shape
    assert jnp.allclose(out_bf16, ref, atol=5e-2, rtol=5e-2), "bf16 mismatch vs reference"

    print("KERNEL_OK")
</pallas_src>

<mosaic_0001>
module attributes {stable_mosaic.version = 11 : i64} {
  func.func @kernel(%arg0: i32, %arg1: memref<16x256xf32, #tpu.memory_space<vmem>>, %arg2: memref<160x128xf32, #tpu.memory_space<vmem>>, %arg3: memref<160x1xf32, #tpu.memory_space<vmem>>, %arg4: memref<2x256xf32, #tpu.memory_space<vmem>>) attributes {dimension_semantics = [#tpu.dimension_semantics<parallel>], iteration_bounds = array<i64: 1>, scalar_prefetch = 0 : i64, scratch_operands = 0 : i64, tpu.core_type = #tpu.core_type<tc>, window_params = [{transform_indices = @transform_0, window_bounds = array<i64: 16, 256>}, {pipeline_mode = #tpu.pipeline_mode<synchronous>, transform_indices = @transform_1, window_bounds = array<i64: 160, 128>}, {pipeline_mode = #tpu.pipeline_mode<synchronous>, transform_indices = @transform_2, window_bounds = array<i64: 160, 1>}, {transform_indices = @transform_3, window_bounds = array<i64: 2, 256>}]} {
    %c0 = arith.constant 0 : index
    %c0_0 = arith.constant 0 : index
    %0 = vector.load %arg1[%c0, %c0_0] : memref<16x256xf32, #tpu.memory_space<vmem>>, vector<16x256xf32>
    %c0_1 = arith.constant 0 : index
    %c0_2 = arith.constant 0 : index
    %1 = vector.load %arg2[%c0_1, %c0_2] : memref<160x128xf32, #tpu.memory_space<vmem>>, vector<64x16xf32>
    %c0_3 = arith.constant 0 : index
    %c0_4 = arith.constant 0 : index
    %2 = vector.load %arg3[%c0_3, %c0_4] : memref<160x1xf32, #tpu.memory_space<vmem>>, vector<64x1xf32>
    %cst = arith.constant dense<0.000000e+00> : vector<64x256xf32>
    %3 = tpu.matmul %1, %0, %cst {dimension_numbers = #tpu.dot_dimension_numbers<[1], [0], [0], [1], [0, 0, 1, 1], [], []>} : vector<64x16xf32>, vector<16x256xf32>, vector<64x256xf32> -> vector<64x256xf32>
    %4 = vector.broadcast %2 : vector<64x1xf32> to vector<64x256xf32>
    %5 = arith.addf %3, %4 : vector<64x256xf32>
    %cst_5 = arith.constant 0.000000e+00 : f32
    %6 = vector.broadcast %cst_5 : f32 to vector<64x256xf32>
    %7 = arith.maximumf %5, %6 : vector<64x256xf32>
    %c64 = arith.constant 64 : index
    %c0_6 = arith.constant 0 : index
    %8 = vector.load %arg2[%c64, %c0_6] : memref<160x128xf32, #tpu.memory_space<vmem>>, vector<32x64xf32>
    %c64_7 = arith.constant 64 : index
    %c0_8 = arith.constant 0 : index
    %9 = vector.load %arg3[%c64_7, %c0_8] : memref<160x1xf32, #tpu.memory_space<vmem>>, vector<32x1xf32>
    %cst_9 = arith.constant dense<0.000000e+00> : vector<32x256xf32>
    %10 = tpu.matmul %8, %7, %cst_9 {dimension_numbers = #tpu.dot_dimension_numbers<[1], [0], [0], [1], [0, 0, 1, 1], [], []>} : vector<32x64xf32>, vector<64x256xf32>, vector<32x256xf32> -> vector<32x256xf32>
    %11 = vector.broadcast %9 : vector<32x1xf32> to vector<32x256xf32>
    %12 = arith.addf %10, %11 : vector<32x256xf32>
    %cst_10 = arith.constant 0.000000e+00 : f32
    %13 = vector.broadcast %cst_10 : f32 to vector<32x256xf32>
    %14 = arith.maximumf %12, %13 : vector<32x256xf32>
    %c96 = arith.constant 96 : index
    %c0_11 = arith.constant 0 : index
    %15 = vector.load %arg2[%c96, %c0_11] : memref<160x128xf32, #tpu.memory_space<vmem>>, vector<16x32xf32>
    %c96_12 = arith.constant 96 : index
    %c0_13 = arith.constant 0 : index
    %16 = vector.load %arg3[%c96_12, %c0_13] : memref<160x1xf32, #tpu.memory_space<vmem>>, vector<16x1xf32>
    %cst_14 = arith.constant dense<0.000000e+00> : vector<16x256xf32>
    %17 = tpu.matmul %15, %14, %cst_14 {dimension_numbers = #tpu.dot_dimension_numbers<[1], [0], [0], [1], [0, 0, 1, 1], [], []>} : vector<16x32xf32>, vector<32x256xf32>, vector<16x256xf32> -> vector<16x256xf32>
    %18 = vector.broadcast %16 : vector<16x1xf32> to vector<16x256xf32>
    %19 = arith.addf %17, %18 : vector<16x256xf32>
    %cst_15 = arith.constant 0.000000e+00 : f32
    %20 = vector.broadcast %cst_15 : f32 to vector<16x256xf32>
    %21 = arith.maximumf %19, %20 : vector<16x256xf32>
    %c112 = arith.constant 112 : index
    %c0_16 = arith.constant 0 : index
    %22 = vector.load %arg2[%c112, %c0_16] : memref<160x128xf32, #tpu.memory_space<vmem>>, vector<8x16xf32>
    %c112_17 = arith.constant 112 : index
    %c0_18 = arith.constant 0 : index
    %23 = vector.load %arg3[%c112_17, %c0_18] : memref<160x1xf32, #tpu.memory_space<vmem>>, vector<8x1xf32>
    %cst_19 = arith.constant dense<0.000000e+00> : vector<8x256xf32>
    %24 = tpu.matmul %22, %21, %cst_19 {dimension_numbers = #tpu.dot_dimension_numbers<[1], [0], [0], [1], [0, 0, 1, 1], [], []>} : vector<8x16xf32>, vector<16x256xf32>, vector<8x256xf32> -> vector<8x256xf32>
    %25 = vector.broadcast %23 : vector<8x1xf32> to vector<8x256xf32>
    %26 = arith.addf %24, %25 : vector<8x256xf32>
    %cst_20 = arith.constant 0.000000e+00 : f32
    %27 = vector.broadcast %cst_20 : f32 to vector<8x256xf32>
    %28 = arith.maximumf %26, %27 : vector<8x256xf32>
    %c128 = arith.constant 128 : index
    %c0_21 = arith.constant 0 : index
    %29 = vector.load %arg2[%c128, %c0_21] : memref<160x128xf32, #tpu.memory_space<vmem>>, vector<4x8xf32>
    %c128_22 = arith.constant 128 : index
    %c0_23 = arith.constant 0 : index
    %30 = vector.load %arg3[%c128_22, %c0_23] : memref<160x1xf32, #tpu.memory_space<vmem>>, vector<4x1xf32>
    %cst_24 = arith.constant dense<0.000000e+00> : vector<4x256xf32>
    %31 = tpu.matmul %29, %28, %cst_24 {dimension_numbers = #tpu.dot_dimension_numbers<[1], [0], [0], [1], [0, 0, 1, 1], [], []>} : vector<4x8xf32>, vector<8x256xf32>, vector<4x256xf32> -> vector<4x256xf32>
    %32 = vector.broadcast %30 : vector<4x1xf32> to vector<4x256xf32>
    %33 = arith.addf %31, %32 : vector<4x256xf32>
    %cst_25 = arith.constant 0.000000e+00 : f32
    %34 = vector.broadcast %cst_25 : f32 to vector<4x256xf32>
    %35 = arith.maximumf %33, %34 : vector<4x256xf32>
    %c144 = arith.constant 144 : index
    %c0_26 = arith.constant 0 : index
    %36 = vector.load %arg2[%c144, %c0_26] : memref<160x128xf32, #tpu.memory_space<vmem>>, vector<2x4xf32>
    %c144_27 = arith.constant 144 : index
    %c0_28 = arith.constant 0 : index
    %37 = vector.load %arg3[%c144_27, %c0_28] : memref<160x1xf32, #tpu.memory_space<vmem>>, vector<2x1xf32>
    %cst_29 = arith.constant dense<0.000000e+00> : vector<2x256xf32>
    %38 = tpu.matmul %36, %35, %cst_29 {dimension_numbers = #tpu.dot_dimension_numbers<[1], [0], [0], [1], [0, 0, 1, 1], [], []>} : vector<2x4xf32>, vector<4x256xf32>, vector<2x256xf32> -> vector<2x256xf32>
    %39 = vector.broadcast %37 : vector<2x1xf32> to vector<2x256xf32>
    %40 = arith.addf %38, %39 : vector<2x256xf32>
    %c0_30 = arith.constant 0 : index
    %c0_31 = arith.constant 0 : index
    %41 = vector.load %arg4[%c0_30, %c0_31] : memref<2x256xf32, #tpu.memory_space<vmem>>, vector<2x256xf32>
    tpu.vector_store %arg4[%c0_30, %c0_31], %40 {strides = array<i32>} : memref<2x256xf32, #tpu.memory_space<vmem>>, vector<2x256xf32>,
    return
  }
  func.func @transform_0(%arg0: i32) -> (i32, i32) {
    %c0_i32 = arith.constant 0 : i32
    %c0_i32_0 = arith.constant 0 : i32
    return %c0_i32, %arg0 : i32, i32
  }
  func.func @transform_1(%arg0: i32) -> (i32, i32) {
    %c0_i32 = arith.constant 0 : i32
    %c0_i32_0 = arith.constant 0 : i32
    %c0_i32_1 = arith.constant 0 : i32
    return %c0_i32, %c0_i32_0 : i32, i32
  }
  func.func @transform_2(%arg0: i32) -> (i32, i32) {
    %c0_i32 = arith.constant 0 : i32
    %c0_i32_0 = arith.constant 0 : i32
    %c0_i32_1 = arith.constant 0 : i32
    return %c0_i32, %c0_i32_0 : i32, i32
  }
  func.func @transform_3(%arg0: i32) -> (i32, i32) {
    %c0_i32 = arith.constant 0 : i32
    %c0_i32_0 = arith.constant 0 : i32
    return %c0_i32, %arg0 : i32, i32
  }
}

</mosaic_0001>

<llo_original>
// kernel: tpu_custom_call.1
$region0: #{tpu_custom_call.1}
  #allocation0 [shape = 'u32[]', space=smem, size = 0x4, offset = 0x4, fixed_abs, tag = 'smem constant byte address 0x4 - core index']
  #allocation1 [shape = 'u32[144,128]{1,0:T(1,128)}', space=vmem, size = 0x12000, scoped, tag = 'internal scratch']
  %s0 = inlined_call_operand.hbm [shape: f32[16,256], index: 0, kind: input, shape index: {}]
  %s1 = inlined_call_operand.vmem [shape: f32[160,128], index: 1, kind: input, shape index: {}]
  %s2 = inlined_call_operand.vmem [shape: f32[160,1], index: 2, kind: input, shape index: {}]
  %s3 = inlined_call_operand.hbm [shape: f32[2,256], index: 3, kind: output, shape index: {}]
  %s4 = sld [smem:[#allocation0]]
  $region26: #{tpu_custom_call.1} parent=0
    _
  %s6 = ssub.s32 1, %s4
  %s7 = scalar_select 0, %s6, %s4
  $region1: #{tpu_custom_call.1} parent=0
    #allocation2 [shape = 'u8[16384]{0}', space=vmem, size = 0x4000, scoped, tag = 'input window, operand 0, single buffered']
    #allocation3 [shape = 's32[1]{0}', space=sflag, size = 0x4, scoped, tag = 'scoped memory for tpu_custom_call.1']
    #allocation4 [shape = 's32[1]{0}', space=sflag, size = 0x4, scoped, tag = 'scoped memory for tpu_custom_call.1']
    #allocation5 [shape = 'u8[2048]{0}', space=vmem, size = 0x800, scoped, tag = 'output window, operand 0, single buffered']
    %8 = vsyncpa [#allocation3], 0
    %9 = vsyncpa [#allocation4], 0
    // Predicated region
    $region2: #{tpu_custom_call.1} parent=1 // pred_check
      _
    $region3: #{tpu_custom_call.1} parent=1 // pred_check_branch
      %11 = sbr.rel (0) target = $region5
    $region4: #{tpu_custom_call.1} parent=1 // pred_region
      %s13 = ssub.s32 512, 512
      %14 = vsyncadd [#allocation3], %s13
      %s15 = sshll.u32 [#allocation2], 4
      %s16 = int_to_ptr.vmem [resolvable:$true] %s15
      %21 = dma.hbm_to_vmem [thread:$0]  %s0, 512, %s16, [#allocation3], 256, 256, 16
    $region5: #{tpu_custom_call.1} parent=1 // pred_fallthru
      _
    // Predicated region
    $region6: #{tpu_custom_call.1} parent=1 // pred_check
      _
    $region7: #{tpu_custom_call.1} parent=1 // pred_check_branch
      %23 = sbr.rel (0) target = $region9
    $region8: #{tpu_custom_call.1} parent=1 // pred_region
      _
    $region9: #{tpu_custom_call.1} parent=1 // pred_fallthru
      _
    // Predicated region
    $region10: #{tpu_custom_call.1} parent=1 // pred_check
      _
    $region11: #{tpu_custom_call.1} parent=1 // pred_check_branch
      %25 = sbr.rel (0) target = $region13
    $region12: #{tpu_custom_call.1} parent=1 // pred_region
      _
    $region13: #{tpu_custom_call.1} parent=1 // pred_fallthru
      _
    // Predicated region
    $region14: #{tpu_custom_call.1} parent=1 // pred_check
      _
    $region15: #{tpu_custom_call.1} parent=1 // pred_check_branch
      %27 = sbr.rel (0) target = $region17
    $region16: #{tpu_custom_call.1} parent=1 // pred_region
      %28 = dma.done [#allocation3], 512
    $region17: #{tpu_custom_call.1} parent=1 // pred_fallthru
      _
    %v29 = vld [vmem:[#allocation2] sm:$0xff]
    %v30 = vld [vmem:[#allocation2 + $0x8] sm:$0xff]
    %v31 = vld [vmem:[#allocation2 + $0x10] sm:$0xff]
    %v32 = vld [vmem:[#allocation2 + $0x18] sm:$0xff]
    %v33 = vld [vmem:[%s1] sm:$0xff]
    %v34 = vld [vmem:[%s1 + $0x8] sm:$0xff]
    %v35 = vld [vmem:[%s1 + $0x10] sm:$0xff]
    %v36 = vld [vmem:[%s1 + $0x18] sm:$0xff]
    %v37 = vld [vmem:[%s1 + $0x20] sm:$0xff]
    %v38 = vld [vmem:[%s1 + $0x28] sm:$0xff]
    %v39 = vld [vmem:[%s1 + $0x30] sm:$0xff]
    %v40 = vld [vmem:[%s1 + $0x38] sm:$0xff]
    %v41 = vld [vmem:[%s2] sm:$0xff]
    %v42 = vld [vmem:[%s2 + $0x8] sm:$0xff]
    %v43 = vld [vmem:[%s2 + $0x10] sm:$0xff]
    %v44 = vld [vmem:[%s2 + $0x18] sm:$0xff]
    %v45 = vld [vmem:[%s2 + $0x20] sm:$0xff]
    %v46 = vld [vmem:[%s2 + $0x28] sm:$0xff]
    %v47 = vld [vmem:[%s2 + $0x30] sm:$0xff]
    %v48 = vld [vmem:[%s2 + $0x38] sm:$0xff]
    %50 = vset.pattern.permute.xlu0 0
    %51 = vperm.xlu0 %50, %v41
    %v52 = vpop.permute.xlu0 %51
    %55 = vset.pattern.permute.xlu0 0
    %56 = vperm.xlu0 %55, %v42
    %v57 = vpop.permute.xlu0 %56
    %60 = vset.pattern.permute.xlu0 0
    %61 = vperm.xlu0 %60, %v43
    %v62 = vpop.permute.xlu0 %61
    %65 = vset.pattern.permute.xlu0 0
    %66 = vperm.xlu0 %65, %v44
    %v67 = vpop.permute.xlu0 %66
    %70 = vset.pattern.permute.xlu0 0
    %71 = vperm.xlu0 %70, %v45
    %v72 = vpop.permute.xlu0 %71
    %75 = vset.pattern.permute.xlu0 0
    %76 = vperm.xlu0 %75, %v46
    %v77 = vpop.permute.xlu0 %76
    %80 = vset.pattern.permute.xlu0 0
    %81 = vperm.xlu0 %80, %v47
    %v82 = vpop.permute.xlu0 %81
    %85 = vset.pattern.permute.xlu0 0
    %86 = vperm.xlu0 %85, %v48
    %v87 = vpop.permute.xlu0 %86
    %vm89 = vcmask 130048
    %v91 = vsel %vm89, %v33, 0
    %v94 = vsel %vm89, %v34, 0
    %v97 = vsel %vm89, %v35, 0
    %v100 = vsel %vm89, %v36, 0
    %v103 = vsel %vm89, %v37, 0
    %v106 = vsel %vm89, %v38, 0
    %v109 = vsel %vm89, %v39, 0
    %v112 = vsel %vm89, %v40, 0
    %114 = vmatprep.subr.mxu0 %v30
    %115 = vmatpush1.msra.mxu0 %v29
    %116 = vmatprep.subr.mxu0 %v32
    %117 = vmatpush1.msra.mxu0 %v31
    %118 = vmatprep.subr.mxu0 0.0
    %119 = vmatpush1.msra.mxu0 0.0
    %120 = vmatprep.subr.mxu0 0.0
    %121 = vmatpush1.msra.mxu0 0.0
    %122 = vmatprep.subr.mxu0 0.0
    %123 = vmatpush1.msra.mxu0 0.0
    %124 = vmatprep.subr.mxu0 0.0
    %125 = vmatpush1.msra.mxu0 0.0
    %126 = vmatprep.subr.mxu0 0.0
    %127 = vmatpush1.msra.mxu0 0.0
    %128 = vmatprep.subr.mxu0 0.0
    %129 = vmatpush1.msra.mxu0 0.0
    %130 = vmatprep.subr.mxu0 0.0
    %131 = vmatpush1.msra.mxu0 0.0
    %132 = vmatprep.subr.mxu0 0.0
    %133 = vmatpush1.msra.mxu0 0.0
    %134 = vmatprep.subr.mxu0 0.0
    %135 = vmatpush1.msra.mxu0 0.0
    %136 = vmatprep.subr.mxu0 0.0
    %137 = vmatpush1.msra.mxu0 0.0
    %138 = vmatprep.subr.mxu0 0.0
    %139 = vmatpush1.msra.mxu0 0.0
    %140 = vmatprep.subr.mxu0 0.0
    %141 = vmatpush1.msra.mxu0 0.0
    %142 = vmatprep.subr.mxu0 0.0
    %143 = vmatpush1.msra.mxu0 0.0
    %144 = vmatprep.subr.mxu0 0.0
    %145 = vmatpush1.msra.mxu0 0.0
    %146 = vmatprep.subr.mxu0 0.0
    %147 = vmatpush1.msra.mxu0 0.0
    %148 = vmatprep.subr.mxu0 0.0
    %149 = vmatpush1.msra.mxu0 0.0
    %150 = vmatprep.subr.mxu0 0.0
    %151 = vmatpush1.msra.mxu0 0.0
    %152 = vmatprep.subr.mxu0 0.0
    %153 = vmatpush1.msra.mxu0 0.0
    %154 = vmatprep.subr.mxu0 0.0
    %155 = vmatpush1.msra.mxu0 0.0
    %156 = vmatprep.subr.mxu0 0.0
    %157 = vmatpush1.msra.mxu0 0.0
    %158 = vmatprep.subr.mxu0 0.0
    %159 = vmatpush1.msra.mxu0 0.0
    %160 = vmatprep.subr.mxu0 0.0
    %161 = vmatpush1.msra.mxu0 0.0
    %162 = vmatprep.subr.mxu0 0.0
    %163 = vmatpush1.msra.mxu0 0.0
    %164 = vmatprep.subr.mxu0 0.0
    %165 = vmatpush1.msra.mxu0 0.0
    %166 = vmatprep.subr.mxu0 0.0
    %167 = vmatpush1.msra.mxu0 0.0
    %168 = vmatprep.subr.mxu0 0.0
    %169 = vmatpush1.msra.mxu0 0.0
    %170 = vmatprep.subr.mxu0 0.0
    %171 = vmatpush1.msra.mxu0 0.0
    %172 = vmatprep.subr.mxu0 0.0
    %173 = vmatpush1.msra.mxu0 0.0
    %174 = vmatprep.subr.mxu0 0.0
    %175 = vmatpush1.msra.mxu0 0.0
    %176 = vmatprep.subr.mxu0 0.0
    %177 = vmatpush1.msra.mxu0 0.0
    %178 = vmatprep.mubr.f32.mxu0 0.0
    %179 = vmatmul.mubr.f32.gmra.mrb[0].mxu0 %v91
    %v180 = vpop.f32.mrb[0].mxu0
    %v181 = vadd.f32 %v52, %v180
    %v182 = vpop.f32.mrb[0].mxu0
    %v183 = vadd.f32 %v52, %v182
    %184 = vmatprep.mubr.f32.mxu0 0.0
    %185 = vmatmul.mubr.f32.gmra.mrb[0].mxu0 %v94
    %v186 = vpop.f32.mrb[0].mxu0
    %v187 = vadd.f32 %v57, %v186
    %v188 = vpop.f32.mrb[0].mxu0
    %v189 = vadd.f32 %v57, %v188
    %190 = vmatprep.mubr.f32.mxu0 0.0
    %191 = vmatmul.mubr.f32.gmra.mrb[0].mxu0 %v97
    %v192 = vpop.f32.mrb[0].mxu0
    %v193 = vadd.f32 %v62, %v192
    %v194 = vpop.f32.mrb[0].mxu0
    %v195 = vadd.f32 %v62, %v194
    %196 = vmatprep.mubr.f32.mxu0 0.0
    %197 = vmatmul.mubr.f32.gmra.mrb[0].mxu0 %v100
    %v198 = vpop.f32.mrb[0].mxu0
    %v199 = vadd.f32 %v67, %v198
    %v200 = vpop.f32.mrb[0].mxu0
    %v201 = vadd.f32 %v67, %v200
    %202 = vmatprep.mubr.f32.mxu0 0.0
    %203 = vmatmul.mubr.f32.gmra.mrb[0].mxu0 %v103
    %v204 = vpop.f32.mrb[0].mxu0
    %v205 = vadd.f32 %v72, %v204
    %v206 = vpop.f32.mrb[0].mxu0
    %v207 = vadd.f32 %v72, %v206
    %208 = vmatprep.mubr.f32.mxu0 0.0
    %209 = vmatmul.mubr.f32.gmra.mrb[0].mxu0 %v106
    %v210 = vpop.f32.mrb[0].mxu0
    %v211 = vadd.f32 %v77, %v210
    %v212 = vpop.f32.mrb[0].mxu0
    %v213 = vadd.f32 %v77, %v212
    %214 = vmatprep.mubr.f32.mxu0 0.0
    %215 = vmatmul.mubr.f32.gmra.mrb[0].mxu0 %v109
    %v216 = vpop.f32.mrb[0].mxu0
    %v217 = vadd.f32 %v82, %v216
    %v218 = vpop.f32.mrb[0].mxu0
    %v219 = vadd.f32 %v82, %v218
    %220 = vmatprep.mubr.f32.mxu0 0.0
    %221 = vmatmul.mubr.f32.gmra.mrb[0].mxu0 %v112
    %v222 = vpop.f32.mrb[0].mxu0
    %v223 = vadd.f32 %v87, %v222
    %v224 = vpop.f32.mrb[0].mxu0
    %v225 = vadd.f32 %v87, %v224
    %226 = vdwg.mxu0
    %v227 = vmax.f32 %v181, 0.0
    %v228 = vmax.f32 %v183, 0.0
    %v229 = vmax.f32 %v187, 0.0
    %v230 = vmax.f32 %v189, 0.0
    %v231 = vmax.f32 %v193, 0.0
    %v232 = vmax.f32 %v195, 0.0
    %v233 = vmax.f32 %v199, 0.0
    %v234 = vmax.f32 %v201, 0.0
    %v235 = vmax.f32 %v205, 0.0
    %v236 = vmax.f32 %v207, 0.0
    %v237 = vmax.f32 %v211, 0.0
    %v238 = vmax.f32 %v213, 0.0
    %v239 = vmax.f32 %v217, 0.0
    %v240 = vmax.f32 %v219, 0.0
    %v241 = vmax.f32 %v223, 0.0
    %v242 = vmax.f32 %v225, 0.0
    %v243 = vld [vmem:[%s1 + $0x40] sm:$0xff]
    %v244 = vld [vmem:[%s1 + $0x48] sm:$0xff]
    %v245 = vld [vmem:[%s1 + $0x50] sm:$0xff]
    %v246 = vld [vmem:[%s1 + $0x58] sm:$0xff]
    %v247 = vld [vmem:[%s2 + $0x40] sm:$0xff]
    %v248 = vld [vmem:[%s2 + $0x48] sm:$0xff]
    %v249 = vld [vmem:[%s2 + $0x50] sm:$0xff]
    %v250 = vld [vmem:[%s2 + $0x58] sm:$0xff]
    %252 = vset.pattern.permute.xlu0 0
    %253 = vperm.xlu0 %252, %v247
    %v254 = vpop.permute.xlu0 %253
    %257 = vset.pattern.permute.xlu0 0
    %258 = vperm.xlu0 %257, %v248
    %v259 = vpop.permute.xlu0 %258
    %262 = vset.pattern.permute.xlu0 0
    %263 = vperm.xlu0 %262, %v249
    %v264 = vpop.permute.xlu0 %263
    %267 = vset.pattern.permute.xlu0 0
    %268 = vperm.xlu0 %267, %v250
    %v269 = vpop.permute.xlu0 %268
    %vm271 = vcmask 523264
    %v273 = vsel %vm271, %v243, 0
    %v276 = vsel %vm271, %v244, 0
    %v279 = vsel %vm271, %v245, 0
    %v282 = vsel %vm271, %v246, 0
    %284 = vmatprep.subr.mxu0 %v228
    %285 = vmatpush1.msra.mxu0 %v227
    %286 = vmatprep.subr.mxu0 %v230
    %287 = vmatpush1.msra.mxu0 %v229
    %288 = vmatprep.subr.mxu0 %v232
    %289 = vmatpush1.msra.mxu0 %v231
    %290 = vmatprep.subr.mxu0 %v234
    %291 = vmatpush1.msra.mxu0 %v233
    %292 = vmatprep.subr.mxu0 %v236
    %293 = vmatpush1.msra.mxu0 %v235
    %294 = vmatprep.subr.mxu0 %v238
    %295 = vmatpush1.msra.mxu0 %v237
    %296 = vmatprep.subr.mxu0 %v240
    %297 = vmatpush1.msra.mxu0 %v239
    %298 = vmatprep.subr.mxu0 %v242
    %299 = vmatpush1.msra.mxu0 %v241
    %300 = vmatprep.subr.mxu0 0.0
    %301 = vmatpush1.msra.mxu0 0.0
    %302 = vmatprep.subr.mxu0 0.0
    %303 = vmatpush1.msra.mxu0 0.0
    %304 = vmatprep.subr.mxu0 0.0
    %305 = vmatpush1.msra.mxu0 0.0
    %306 = vmatprep.subr.mxu0 0.0
    %307 = vmatpush1.msra.mxu0 0.0
    %308 = vmatprep.subr.mxu0 0.0
    %309 = vmatpush1.msra.mxu0 0.0
    %310 = vmatprep.subr.mxu0 0.0
    %311 = vmatpush1.msra.mxu0 0.0
    %312 = vmatprep.subr.mxu0 0.0
    %313 = vmatpush1.msra.mxu0 0.0
    %314 = vmatprep.subr.mxu0 0.0
    %315 = vmatpush1.msra.mxu0 0.0
    %316 = vmatprep.subr.mxu0 0.0
    %317 = vmatpush1.msra.mxu0 0.0
    %318 = vmatprep.subr.mxu0 0.0
    %319 = vmatpush1.msra.mxu0 0.0
    %320 = vmatprep.subr.mxu0 0.0
    %321 = vmatpush1.msra.mxu0 0.0
    %322 = vmatprep.subr.mxu0 0.0
    %323 = vmatpush1.msra.mxu0 0.0
    %324 = vmatprep.subr.mxu0 0.0
    %325 = vmatpush1.msra.mxu0 0.0
    %326 = vmatprep.subr.mxu0 0.0
    %327 = vmatpush1.msra.mxu0 0.0
    %328 = vmatprep.subr.mxu0 0.0
    %329 = vmatpush1.msra.mxu0 0.0
    %330 = vmatprep.subr.mxu0 0.0
    %331 = vmatpush1.msra.mxu0 0.0
    %332 = vmatprep.subr.mxu0 0.0
    %333 = vmatpush1.msra.mxu0 0.0
    %334 = vmatprep.subr.mxu0 0.0
    %335 = vmatpush1.msra.mxu0 0.0
    %336 = vmatprep.subr.mxu0 0.0
    %337 = vmatpush1.msra.mxu0 0.0
    %338 = vmatprep.subr.mxu0 0.0
    %339 = vmatpush1.msra.mxu0 0.0
    %340 = vmatprep.subr.mxu0 0.0
    %341 = vmatpush1.msra.mxu0 0.0
    %342 = vmatprep.subr.mxu0 0.0
    %343 = vmatpush1.msra.mxu0 0.0
    %344 = vmatprep.subr.mxu0 0.0
    %345 = vmatpush1.msra.mxu0 0.0
    %346 = vmatprep.subr.mxu0 0.0
    %347 = vmatpush1.msra.mxu0 0.0
    %348 = vmatprep.mubr.f32.mxu0 0.0
    %349 = vmatmul.mubr.f32.gmra.mrb[0].mxu0 %v273
    %v350 = vpop.f32.mrb[0].mxu0
    %v351 = vadd.f32 %v254, %v350
    %v352 = vpop.f32.mrb[0].mxu0
    %v353 = vadd.f32 %v254, %v352
    %354 = vmatprep.mubr.f32.mxu0 0.0
    %355 = vmatmul.mubr.f32.gmra.mrb[0].mxu0 %v276
    %v356 = vpop.f32.mrb[0].mxu0
    %v357 = vadd.f32 %v259, %v356
    %v358 = vpop.f32.mrb[0].mxu0
    %v359 = vadd.f32 %v259, %v358
    %360 = vmatprep.mubr.f32.mxu0 0.0
    %361 = vmatmul.mubr.f32.gmra.mrb[0].mxu0 %v279
    %v362 = vpop.f32.mrb[0].mxu0
    %v363 = vadd.f32 %v264, %v362
    %v364 = vpop.f32.mrb[0].mxu0
    %v365 = vadd.f32 %v264, %v364
    %366 = vmatprep.mubr.f32.mxu0 0.0
    %367 = vmatmul.mubr.f32.gmra.mrb[0].mxu0 %v282
    %v368 = vpop.f32.mrb[0].mxu0
    %v369 = vadd.f32 %v269, %v368
    %v370 = vpop.f32.mrb[0].mxu0
    %v371 = vadd.f32 %v269, %v370
    %372 = vdwg.mxu0
    %v373 = vmax.f32 %v351, 0.0
    %v374 = vmax.f32 %v353, 0.0
    %v375 = vmax.f32 %v357, 0.0
    %v376 = vmax.f32 %v359, 0.0
    %v377 = vmax.f32 %v363, 0.0
    %v378 = vmax.f32 %v365, 0.0
    %v379 = vmax.f32 %v369, 0.0
    %v380 = vmax.f32 %v371, 0.0
    %v381 = vld [vmem:[%s1 + $0x60] sm:$0xff]
    %v382 = vld [vmem:[%s1 + $0x68] sm:$0xff]
    %v383 = vld [vmem:[%s2 + $0x60] sm:$0xff]
    %v384 = vld [vmem:[%s2 + $0x68] sm:$0xff]
    %386 = vset.pattern.permute.xlu0 0
    %387 = vperm.xlu0 %386, %v383
    %v388 = vpop.permute.xlu0 %387
    %391 = vset.pattern.permute.xlu0 0
    %392 = vperm.xlu0 %391, %v384
    %v393 = vpop.permute.xlu0 %392
    %vm395 = vcmask 261120
    %v397 = vsel %vm395, %v381, 0
    %v400 = vsel %vm395, %v382, 0
    %402 = vmatprep.subr.mxu0 %v374
    %403 = vmatpush1.msra.mxu0 %v373
    %404 = vmatprep.subr.mxu0 %v376
    %405 = vmatpush1.msra.mxu0 %v375
    %406 = vmatprep.subr.mxu0 %v378
    %407 = vmatpush1.msra.mxu0 %v377
    %408 = vmatprep.subr.mxu0 %v380
    %409 = vmatpush1.msra.mxu0 %v379
    %410 = vmatprep.subr.mxu0 0.0
    %411 = vmatpush1.msra.mxu0 0.0
    %412 = vmatprep.subr.mxu0 0.0
    %413 = vmatpush1.msra.mxu0 0.0
    %414 = vmatprep.subr.mxu0 0.0
    %415 = vmatpush1.msra.mxu0 0.0
    %416 = vmatprep.subr.mxu0 0.0
    %417 = vmatpush1.msra.mxu0 0.0
    %418 = vmatprep.subr.mxu0 0.0
    %419 = vmatpush1.msra.mxu0 0.0
    %420 = vmatprep.subr.mxu0 0.0
    %421 = vmatpush1.msra.mxu0 0.0
    %422 = vmatprep.subr.mxu0 0.0
    %423 = vmatpush1.msra.mxu0 0.0
    %424 = vmatprep.subr.mxu0 0.0
    %425 = vmatpush1.msra.mxu0 0.0
    %426 = vmatprep.subr.mxu0 0.0
    %427 = vmatpush1.msra.mxu0 0.0
    %428 = vmatprep.subr.mxu0 0.0
    %429 = vmatpush1.msra.mxu0 0.0
    %430 = vmatprep.subr.mxu0 0.0
    %431 = vmatpush1.msra.mxu0 0.0
    %432 = vmatprep.subr.mxu0 0.0
    %433 = vmatpush1.msra.mxu0 0.0
    %434 = vmatprep.subr.mxu0 0.0
    %435 = vmatpush1.msra.mxu0 0.0
    %436 = vmatprep.subr.mxu0 0.0
    %437 = vmatpush1.msra.mxu0 0.0
    %438 = vmatprep.subr.mxu0 0.0
    %439 = vmatpush1.msra.mxu0 0.0
    %440 = vmatprep.subr.mxu0 0.0
    %441 = vmatpush1.msra.mxu0 0.0
    %442 = vmatprep.subr.mxu0 0.0
    %443 = vmatpush1.msra.mxu0 0.0
    %444 = vmatprep.subr.mxu0 0.0
    %445 = vmatpush1.msra.mxu0 0.0
    %446 = vmatprep.subr.mxu0 0.0
    %447 = vmatpush1.msra.mxu0 0.0
    %448 = vmatprep.subr.mxu0 0.0
    %449 = vmatpush1.msra.mxu0 0.0
    %450 = vmatprep.subr.mxu0 0.0
    %451 = vmatpush1.msra.mxu0 0.0
    %452 = vmatprep.subr.mxu0 0.0
    %453 = vmatpush1.msra.mxu0 0.0
    %454 = vmatprep.subr.mxu0 0.0
    %455 = vmatpush1.msra.mxu0 0.0
    %456 = vmatprep.subr.mxu0 0.0
    %457 = vmatpush1.msra.mxu0 0.0
    %458 = vmatprep.subr.mxu0 0.0
    %459 = vmatpush1.msra.mxu0 0.0
    %460 = vmatprep.subr.mxu0 0.0
    %461 = vmatpush1.msra.mxu0 0.0
    %462 = vmatprep.subr.mxu0 0.0
    %463 = vmatpush1.msra.mxu0 0.0
    %464 = vmatprep.subr.mxu0 0.0
    %465 = vmatpush1.msra.mxu0 0.0
    %466 = vmatprep.mubr.f32.mxu0 0.0
    %467 = vmatmul.mubr.f32.gmra.mrb[0].mxu0 %v397
    %v468 = vpop.f32.mrb[0].mxu0
    %v469 = vadd.f32 %v388, %v468
    %v470 = vpop.f32.mrb[0].mxu0
    %v471 = vadd.f32 %v388, %v470
    %472 = vmatprep.mubr.f32.mxu0 0.0
    %473 = vmatmul.mubr.f32.gmra.mrb[0].mxu0 %v400
    %v474 = vpop.f32.mrb[0].mxu0
    %v475 = vadd.f32 %v393, %v474
    %v476 = vpop.f32.mrb[0].mxu0
    %v477 = vadd.f32 %v393, %v476
    %478 = vdwg.mxu0
    %v479 = vmax.f32 %v469, 0.0
    %v480 = vmax.f32 %v471, 0.0
    %v481 = vmax.f32 %v475, 0.0
    %v482 = vmax.f32 %v477, 0.0
    %v483 = vld [vmem:[%s1 + $0x70] sm:$0xff]
    %v484 = vld [vmem:[%s2 + $0x70] sm:$0xff]
    %486 = vset.pattern.permute.xlu0 0
    %487 = vperm.xlu0 %486, %v484
    %v488 = vpop.permute.xlu0 %487
    %v491 = vsel %vm89, %v483, 0
    %493 = vmatprep.subr.mxu0 %v480
    %494 = vmatpush1.msra.mxu0 %v479
    %495 = vmatprep.subr.mxu0 %v482
    %496 = vmatpush1.msra.mxu0 %v481
    %497 = vmatprep.subr.mxu0 0.0
    %498 = vmatpush1.msra.mxu0 0.0
    %499 = vmatprep.subr.mxu0 0.0
    %500 = vmatpush1.msra.mxu0 0.0
    %501 = vmatprep.subr.mxu0 0.0
    %502 = vmatpush1.msra.mxu0 0.0
    %503 = vmatprep.subr.mxu0 0.0
    %504 = vmatpush1.msra.mxu0 0.0
    %505 = vmatprep.subr.mxu0 0.0
    %506 = vmatpush1.msra.mxu0 0.0
    %507 = vmatprep.subr.mxu0 0.0
    %508 = vmatpush1.msra.mxu0 0.0
    %509 = vmatprep.subr.mxu0 0.0
    %510 = vmatpush1.msra.mxu0 0.0
    %511 = vmatprep.subr.mxu0 0.0
    %512 = vmatpush1.msra.mxu0 0.0
    %513 = vmatprep.subr.mxu0 0.0
    %514 = vmatpush1.msra.mxu0 0.0
    %515 = vmatprep.subr.mxu0 0.0
    %516 = vmatpush1.msra.mxu0 0.0
    %517 = vmatprep.subr.mxu0 0.0
    %518 = vmatpush1.msra.mxu0 0.0
    %519 = vmatprep.subr.mxu0 0.0
    %520 = vmatpush1.msra.mxu0 0.0
    %521 = vmatprep.subr.mxu0 0.0
    %522 = vmatpush1.msra.mxu0 0.0
    %523 = vmatprep.subr.mxu0 0.0
    %524 = vmatpush1.msra.mxu0 0.0
    %525 = vmatprep.subr.mxu0 0.0
    %526 = vmatpush1.msra.mxu0 0.0
    %527 = vmatprep.subr.mxu0 0.0
    %528 = vmatpush1.msra.mxu0 0.0
    %529 = vmatprep.subr.mxu0 0.0
    %530 = vmatpush1.msra.mxu0 0.0
    %531 = vmatprep.subr.mxu0 0.0
    %532 = vmatpush1.msra.mxu0 0.0
    %533 = vmatprep.subr.mxu0 0.0
    %534 = vmatpush1.msra.mxu0 0.0
    %535 = vmatprep.subr.mxu0 0.0
    %536 = vmatpush1.msra.mxu0 0.0
    %537 = vmatprep.subr.mxu0 0.0
    %538 = vmatpush1.msra.mxu0 0.0
    %539 = vmatprep.subr.mxu0 0.0
    %540 = vmatpush1.msra.mxu0 0.0
    %541 = vmatprep.subr.mxu0 0.0
    %542 = vmatpush1.msra.mxu0 0.0
    %543 = vmatprep.subr.mxu0 0.0
    %544 = vmatpush1.msra.mxu0 0.0
    %545 = vmatprep.subr.mxu0 0.0
    %546 = vmatpush1.msra.mxu0 0.0
    %547 = vmatprep.subr.mxu0 0.0
    %548 = vmatpush1.msra.mxu0 0.0
    %549 = vmatprep.subr.mxu0 0.0
    %550 = vmatpush1.msra.mxu0 0.0
    %551 = vmatprep.subr.mxu0 0.0
    %552 = vmatpush1.msra.mxu0 0.0
    %553 = vmatprep.subr.mxu0 0.0
    %554 = vmatpush1.msra.mxu0 0.0
    %555 = vmatprep.subr.mxu0 0.0
    %556 = vmatpush1.msra.mxu0 0.0
    %557 = vmatprep.mubr.f32.mxu0 0.0
    %558 = vmatmul.mubr.f32.gmra.mrb[0].mxu0 %v491
    %v559 = vpop.f32.mrb[0].mxu0
    %v560 = vadd.f32 %v488, %v559
    %v561 = vpop.f32.mrb[0].mxu0
    %v562 = vadd.f32 %v488, %v561
    %563 = vdwg.mxu0
    %v564 = vmax.f32 %v560, 0.0
    %v565 = vmax.f32 %v562, 0.0
    %v566 = vld [vmem:[%s1 + $0x80] sm:$0xf]
    %v567 = vld [vmem:[%s2 + $0x80] sm:$0xf]
    %569 = vset.pattern.permute.xlu0 0
    %570 = vperm.xlu0 %569, %v567
    %v571 = vpop.permute.xlu0 %570
    %vm573 = vcmask 64512
    %v575 = vsel %vm573, %v566, 0
    %577 = vmatprep.subr.mxu0 %v565
    %578 = vmatpush1.msra.mxu0 %v564
    %579 = vmatprep.subr.mxu0 0.0
    %580 = vmatpush1.msra.mxu0 0.0
    %581 = vmatprep.subr.mxu0 0.0
    %582 = vmatpush1.msra.mxu0 0.0
    %583 = vmatprep.subr.mxu0 0.0
    %584 = vmatpush1.msra.mxu0 0.0
    %585 = vmatprep.subr.mxu0 0.0
    %586 = vmatpush1.msra.mxu0 0.0
    %587 = vmatprep.subr.mxu0 0.0
    %588 = vmatpush1.msra.mxu0 0.0
    %589 = vmatprep.subr.mxu0 0.0
    %590 = vmatpush1.msra.mxu0 0.0
    %591 = vmatprep.subr.mxu0 0.0
    %592 = vmatpush1.msra.mxu0 0.0
    %593 = vmatprep.subr.mxu0 0.0
    %594 = vmatpush1.msra.mxu0 0.0
    %595 = vmatprep.subr.mxu0 0.0
    %596 = vmatpush1.msra.mxu0 0.0
    %597 = vmatprep.subr.mxu0 0.0
    %598 = vmatpush1.msra.mxu0 0.0
    %599 = vmatprep.subr.mxu0 0.0
    %600 = vmatpush1.msra.mxu0 0.0
    %601 = vmatprep.subr.mxu0 0.0
    %602 = vmatpush1.msra.mxu0 0.0
    %603 = vmatprep.subr.mxu0 0.0
    %604 = vmatpush1.msra.mxu0 0.0
    %605 = vmatprep.subr.mxu0 0.0
    %606 = vmatpush1.msra.mxu0 0.0
    %607 = vmatprep.subr.mxu0 0.0
    %608 = vmatpush1.msra.mxu0 0.0
    %609 = vmatprep.subr.mxu0 0.0
    %610 = vmatpush1.msra.mxu0 0.0
    %611 = vmatprep.subr.mxu0 0.0
    %612 = vmatpush1.msra.mxu0 0.0
    %613 = vmatprep.subr.mxu0 0.0
    %614 = vmatpush1.msra.mxu0 0.0
    %615 = vmatprep.subr.mxu0 0.0
    %616 = vmatpush1.msra.mxu0 0.0
    %617 = vmatprep.subr.mxu0 0.0
    %618 = vmatpush1.msra.mxu0 0.0
    %619 = vmatprep.subr.mxu0 0.0
    %620 = vmatpush1.msra.mxu0 0.0
    %621 = vmatprep.subr.mxu0 0.0
    %622 = vmatpush1.msra.mxu0 0.0
    %623 = vmatprep.subr.mxu0 0.0
    %624 = vmatpush1.msra.mxu0 0.0
    %625 = vmatprep.subr.mxu0 0.0
    %626 = vmatpush1.msra.mxu0 0.0
    %627 = vmatprep.subr.mxu0 0.0
    %628 = vmatpush1.msra.mxu0 0.0
    %629 = vmatprep.subr.mxu0 0.0
    %630 = vmatpush1.msra.mxu0 0.0
    %631 = vmatprep.subr.mxu0 0.0
    %632 = vmatpush1.msra.mxu0 0.0
    %633 = vmatprep.subr.mxu0 0.0
    %634 = vmatpush1.msra.mxu0 0.0
    %635 = vmatprep.subr.mxu0 0.0
    %636 = vmatpush1.msra.mxu0 0.0
    %637 = vmatprep.subr.mxu0 0.0
    %638 = vmatpush1.msra.mxu0 0.0
    %639 = vmatprep.subr.mxu0 0.0
    %640 = vmatpush1.msra.mxu0 0.0
    %641 = vmatprep.mubr.f32.mxu0 0.0
    %642 = vmatmul.mubr.f32.gmra.mrb[0].mxu0 %v575
    %v643 = vpop.f32.mrb[0].mxu0
    %v644 = vadd.f32 %v571, %v643
    %v645 = vpop.f32.mrb[0].mxu0
    %v646 = vadd.f32 %v571, %v645
    %647 = vdwg.mxu0
    %v648 = vmax.f32 %v644, 0.0
    %v649 = vmax.f32 %v646, 0.0
    %v650 = vld [vmem:[%s1 + $0x90] sm:$0x3]
    %v651 = vld [vmem:[%s2 + $0x90] sm:$0x3]
    %653 = vset.pattern.permute.xlu0 0
    %654 = vperm.xlu0 %653, %v651
    %v655 = vpop.permute.xlu0 %654
    %vm657 = vcmask 31744
    %v659 = vsel %vm657, %v650, 0
    %vm661 = vcmask 1043456
    %v663 = vsel %vm661, %v648, 0
    %v666 = vsel %vm661, %v649, 0
    %668 = vmatprep.subr.mxu0 %v666
    %669 = vmatpush1.msra.mxu0 %v663
    %670 = vmatprep.subr.mxu0 0.0
    %671 = vmatpush1.msra.mxu0 0.0
    %672 = vmatprep.subr.mxu0 0.0
    %673 = vmatpush1.msra.mxu0 0.0
    %674 = vmatprep.subr.mxu0 0.0
    %675 = vmatpush1.msra.mxu0 0.0
    %676 = vmatprep.subr.mxu0 0.0
    %677 = vmatpush1.msra.mxu0 0.0
    %678 = vmatprep.subr.mxu0 0.0
    %679 = vmatpush1.msra.mxu0 0.0
    %680 = vmatprep.subr.mxu0 0.0
    %681 = vmatpush1.msra.mxu0 0.0
    %682 = vmatprep.subr.mxu0 0.0
    %683 = vmatpush1.msra.mxu0 0.0
    %684 = vmatprep.subr.mxu0 0.0
    %685 = vmatpush1.msra.mxu0 0.0
    %686 = vmatprep.subr.mxu0 0.0
    %687 = vmatpush1.msra.mxu0 0.0
    %688 = vmatprep.subr.mxu0 0.0
    %689 = vmatpush1.msra.mxu0 0.0
    %690 = vmatprep.subr.mxu0 0.0
    %691 = vmatpush1.msra.mxu0 0.0
    %692 = vmatprep.subr.mxu0 0.0
    %693 = vmatpush1.msra.mxu0 0.0
    %694 = vmatprep.subr.mxu0 0.0
    %695 = vmatpush1.msra.mxu0 0.0
    %696 = vmatprep.subr.mxu0 0.0
    %697 = vmatpush1.msra.mxu0 0.0
    %698 = vmatprep.subr.mxu0 0.0
    %699 = vmatpush1.msra.mxu0 0.0
    %700 = vmatprep.subr.mxu0 0.0
    %701 = vmatpush1.msra.mxu0 0.0
    %702 = vmatprep.subr.mxu0 0.0
    %703 = vmatpush1.msra.mxu0 0.0
    %704 = vmatprep.subr.mxu0 0.0
    %705 = vmatpush1.msra.mxu0 0.0
    %706 = vmatprep.subr.mxu0 0.0
    %707 = vmatpush1.msra.mxu0 0.0
    %708 = vmatprep.subr.mxu0 0.0
    %709 = vmatpush1.msra.mxu0 0.0
    %710 = vmatprep.subr.mxu0 0.0
    %711 = vmatpush1.msra.mxu0 0.0
    %712 = vmatprep.subr.mxu0 0.0
    %713 = vmatpush1.msra.mxu0 0.0
    %714 = vmatprep.subr.mxu0 0.0
    %715 = vmatpush1.msra.mxu0 0.0
    %716 = vmatprep.subr.mxu0 0.0
    %717 = vmatpush1.msra.mxu0 0.0
    %718 = vmatprep.subr.mxu0 0.0
    %719 = vmatpush1.msra.mxu0 0.0
    %720 = vmatprep.subr.mxu0 0.0
    %721 = vmatpush1.msra.mxu0 0.0
    %722 = vmatprep.subr.mxu0 0.0
    %723 = vmatpush1.msra.mxu0 0.0
    %724 = vmatprep.subr.mxu0 0.0
    %725 = vmatpush1.msra.mxu0 0.0
    %726 = vmatprep.subr.mxu0 0.0
    %727 = vmatpush1.msra.mxu0 0.0
    %728 = vmatprep.subr.mxu0 0.0
    %729 = vmatpush1.msra.mxu0 0.0
    %730 = vmatprep.subr.mxu0 0.0
    %731 = vmatpush1.msra.mxu0 0.0
    %732 = vmatprep.mubr.f32.mxu0 0.0
    %733 = vmatmul.mubr.f32.gmra.mrb[0].mxu0 %v659
    %v734 = vpop.f32.mrb[0].mxu0
    %v735 = vadd.f32 %v655, %v734
    %v736 = vpop.f32.mrb[0].mxu0
    %v737 = vadd.f32 %v655, %v736
    %738 = vdwg.mxu0
    %v741 = vcombine.low %v735, %v737
    %v743 = vunpack.c.l.s4 1983009808
    %v744 = vunpack.c.0.s8 %v743
    %v745 = vlaneseq
    %v746 = vshrl.u32 %v745, 7
    %v747 = vsub.s32 %v744, %v746
    %v748 = vrot.slane %v741, %v747
    %750 = vst [vmem:[#allocation5] sm:$0xf] %v748
    // Predicated region
    $region18: #{tpu_custom_call.1} parent=1 // pred_check
      _
    $region19: #{tpu_custom_call.1} parent=1 // pred_check_branch
      %752 = sbr.rel (0) target = $region21
    $region20: #{tpu_custom_call.1} parent=1 // pred_region
      %s754 = ssub.s32 64, 64
      %755 = vsyncadd [#allocation4], %s754
      %s757 = sshll.u32 [#allocation5], 4
      %s758 = int_to_ptr.vmem [resolvable:$true] %s757
      %760 = dma.vmem_to_hbm [thread:$0]  %s758, 64, %s3, [#allocation4]
    $region21: #{tpu_custom_call.1} parent=1 // pred_fallthru
      _
    // Predicated region
    $region22: #{tpu_custom_call.1} parent=1 // pred_check
      _
    $region23: #{tpu_custom_call.1} parent=1 // pred_check_branch
      %762 = sbr.rel (0) target = $region25
    $region24: #{tpu_custom_call.1} parent=1 // pred_region
      %763 = dma.done [#allocation4], 64
    $region25: #{tpu_custom_call.1} parent=1 // pred_fallthru
      _
    %764 = vsyncpa [#allocation3], 1
    %765 = vsyncpa [#allocation4], 1

</llo_original>
